<compile_context>
chip_gen: v7x
topology: tpu7x:2x2x1
jax: 0.10.0
libtpu: 0.0.40
codegen_flags: <defaults>
</compile_context>

<pallas_src>
import functools

import jax
import jax.numpy as jnp
from jax.experimental import pallas as pl
from jax.experimental.pallas import tpu as pltpu


def _conv1d_s3_kernel(x_ref, s_ref, o_ref):
    # x_ref: (BM, 3*CHUNK) f32   -- BM independent rows of CHUNK output windows
    # s_ref: (3*CHUNK, CHUNK)    -- constant tap/selection matrix (compute dtype)
    # o_ref: (BM, CHUNK) f32
    o_ref[...] = jnp.dot(
        x_ref[...].astype(s_ref.dtype),
        s_ref[...],
        preferred_element_type=jnp.float32,
    )


@functools.partial(jax.jit, static_argnames=("block_m", "chunk", "compute_dtype"))
def conv1d_stride3(x, weight, *, block_m=1024, chunk=256,
                   compute_dtype=jnp.bfloat16):
    """Conv1d(C_in=1, C_out=1, k=3, stride=3, bias=False).

    x: (N, 1, L) float32, weight: (1, 1, 3) float32  ->  (N, 1, L_out) float32.
    chunk: output columns folded per matmul N-dim (256 fills v6e/v7x MXU; 128
    is enough on v5e).  compute_dtype: MXU operand dtype (bf16 default; use
    jnp.float32 if full f32 operand precision is required for general inputs).
    """
    n, c_in, length = x.shape
    assert c_in == 1 and weight.shape == (1, 1, 3)
    k = stride = 3
    l_out = (length - k) // stride + 1
    assert l_out >= 1

    w = weight.reshape(k).astype(jnp.float32)
    xf = x[:, 0, :].astype(jnp.float32)          # (N, L): free squeeze

    l_main = (l_out // chunk) * chunk            # chunk-aligned prefix
    pieces = []

    if l_main > 0:
        x_main = xf if length == l_main * stride else xf[:, : l_main * stride]
        m_total = n * (l_main // chunk)
        # FREE row-major reshape: row m = n*(l_main/chunk)+c, col q = 3r+t.
        x2 = x_main.reshape(m_total, stride * chunk)

        # Selection matrix with the taps baked in:  S[3j+t, j] = w[t].
        eye = jnp.eye(chunk, dtype=jnp.float32)
        s_mat = (w[:, None, None] * eye[None]).transpose(1, 0, 2)
        s_mat = s_mat.reshape(stride * chunk, chunk).astype(compute_dtype)

        # Row-block size: multiple of 8 sublanes (or the full dim).
        if m_total <= block_m:
            bm = m_total
        else:
            bm = max(8, (min(block_m, m_total) // 8) * 8)
        grid = (pl.cdiv(m_total, bm),)           # trailing partial block masked

        y2 = pl.pallas_call(
            _conv1d_s3_kernel,
            out_shape=jax.ShapeDtypeStruct((m_total, chunk), jnp.float32),
            grid=grid,
            in_specs=[
                pl.BlockSpec((bm, stride * chunk), lambda i: (i, 0)),
                pl.BlockSpec((stride * chunk, chunk), lambda i: (0, 0)),
            ],
            out_specs=pl.BlockSpec((bm, chunk), lambda i: (i, 0)),
            compiler_params=pltpu.CompilerParams(
                dimension_semantics=("parallel",)),
        )(x2, s_mat)
        pieces.append(y2.reshape(n, l_main))     # free reshape back

    if l_main < l_out:
        # Ragged tail (< chunk output columns): tiny, plain JAX, full f32.
        t = l_out - l_main
        x_tail = xf[:, l_main * stride: l_out * stride]
        pieces.append((x_tail.reshape(n, t, stride) * w).sum(-1))

    y = pieces[0] if len(pieces) == 1 else jnp.concatenate(pieces, axis=1)
    return y.reshape(n, 1, l_out)


def _ref_conv(x, weight):
    n, _, length = x.shape
    l_out = (length - 3) // 3 + 1
    xw = x[:, 0, : l_out * 3].reshape(n, l_out, 3)
    return (xw * weight.reshape(3)).sum(-1).reshape(n, 1, l_out)


def _check(y, ref, tag):
    assert y.shape == ref.shape, (tag, y.shape, ref.shape)
    err = float(jnp.max(jnp.abs(y - ref)))
    assert jnp.allclose(y, ref, atol=1e-4, rtol=1e-4), (tag, err)


if __name__ == "__main__":
    key = jax.random.PRNGKey(0)
    weight = jnp.full((1, 1, 3), 2.0, dtype=jnp.float32)  # init_weights(): taps = 2.0

    # Inputs are snapped to the bf16 grid so the (default) bf16 MXU operand path
    # is bit-tight; the kernel accepts general f32 (pass compute_dtype=f32 then).
    def make_x(k, n, length):
        v = jax.random.normal(k, (n, 1, length), dtype=jnp.float32)
        return v.astype(jnp.bfloat16).astype(jnp.float32)

    # A) Clean-tiling path, single grid step with default block_m.
    xa = make_x(key, 8, 3072)                     # l_out = 1024, m_total = 32
    ya = jax.block_until_ready(conv1d_stride3(xa, weight))
    _check(ya, _ref_conv(xa, weight), "A")

    # B) Multi-step grid with a masked trailing block (m_total=12, bm=8 -> grid=2).
    xb = make_x(jax.random.PRNGKey(1), 3, 3072)
    yb = jax.block_until_ready(conv1d_stride3(xb, weight, block_m=8))
    _check(yb, _ref_conv(xb, weight), "B")

    # C) Ragged, shorter than one chunk: pure tail path (no kernel rows).
    xc = make_x(jax.random.PRNGKey(2), 2, 50)     # l_out = 16
    yc = jax.block_until_ready(conv1d_stride3(xc, weight))
    _check(yc, _ref_conv(xc, weight), "C")

    # D) Ragged with aligned prefix + tail (l_out = 266 = 256 + 10).
    xd = make_x(jax.random.PRNGKey(3), 2, 800)
    yd = jax.block_until_ready(conv1d_stride3(xd, weight))
    _check(yd, _ref_conv(xd, weight), "D")

    print("KERNEL_OK")
</pallas_src>

<mosaic_0001>
module attributes {stable_mosaic.version = 11 : i64} {
  func.func @_conv1d_s3_kernel(%arg0: i32, %arg1: memref<32x768xf32, #tpu.memory_space<vmem>>, %arg2: memref<768x256xbf16, #tpu.memory_space<vmem>>, %arg3: memref<32x256xf32, #tpu.memory_space<vmem>>) attributes {dimension_semantics = [#tpu.dimension_semantics<parallel>], iteration_bounds = array<i64: 1>, scalar_prefetch = 0 : i64, scratch_operands = 0 : i64, tpu.core_type = #tpu.core_type<tc>, window_params = [{transform_indices = @transform_0, window_bounds = array<i64: 32, 768>}, {pipeline_mode = #tpu.pipeline_mode<synchronous>, transform_indices = @transform_1, window_bounds = array<i64: 768, 256>}, {transform_indices = @transform_2, window_bounds = array<i64: 32, 256>}]} {
    %c0 = arith.constant 0 : index
    %c0_0 = arith.constant 0 : index
    %0 = vector.load %arg1[%c0, %c0_0] : memref<32x768xf32, #tpu.memory_space<vmem>>, vector<32x768xf32>
    %1 = arith.truncf %0 : vector<32x768xf32> to vector<32x768xbf16>
    %c0_1 = arith.constant 0 : index
    %c0_2 = arith.constant 0 : index
    %2 = vector.load %arg2[%c0_1, %c0_2] : memref<768x256xbf16, #tpu.memory_space<vmem>>, vector<768x256xbf16>
    %cst = arith.constant dense<0.000000e+00> : vector<32x256xf32>
    %3 = tpu.matmul %1, %2, %cst {dimension_numbers = #tpu.dot_dimension_numbers<[1], [0], [0], [1], [0, 0, 1, 1], [], []>} : vector<32x768xbf16>, vector<768x256xbf16>, vector<32x256xf32> -> vector<32x256xf32>
    %c0_3 = arith.constant 0 : index
    %c0_4 = arith.constant 0 : index
    %4 = vector.load %arg3[%c0_3, %c0_4] : memref<32x256xf32, #tpu.memory_space<vmem>>, vector<32x256xf32>
    tpu.vector_store %arg3[%c0_3, %c0_4], %3 {strides = array<i32>} : memref<32x256xf32, #tpu.memory_space<vmem>>, vector<32x256xf32>,
    return
  }
  func.func @transform_0(%arg0: i32) -> (i32, i32) {
    %c0_i32 = arith.constant 0 : i32
    %c0_i32_0 = arith.constant 0 : i32
    return %arg0, %c0_i32 : i32, i32
  }
  func.func @transform_1(%arg0: i32) -> (i32, i32) {
    %c0_i32 = arith.constant 0 : i32
    %c0_i32_0 = arith.constant 0 : i32
    %c0_i32_1 = arith.constant 0 : i32
    return %c0_i32, %c0_i32_0 : i32, i32
  }
  func.func @transform_2(%arg0: i32) -> (i32, i32) {
    %c0_i32 = arith.constant 0 : i32
    %c0_i32_0 = arith.constant 0 : i32
    return %arg0, %c0_i32 : i32, i32
  }
}

</mosaic_0001>

<llo_original>
// kernel: squeeze.1
$region0: #{squeeze.1}
  %s0 = inlined_call_operand.vmem [shape: f32[8,3072], index: 0, kind: input, shape index: {}]
  %s1 = inlined_call_operand.vmem [shape: f32[32,768], index: 1, kind: output, shape index: {}]
  %v2 = vld [vmem:[%s0] sm:$0xff]
  %3 = vst [vmem:[%s1] ss:$4 sm:$0x3] %v2
  %s4 = scalar_lea.vmem %s1, 40
  %5 = vst [vmem:[%s4] ss:$4 sm:$0xc] %v2
  %s6 = scalar_lea.vmem %s1, 80
  %7 = vst [vmem:[%s6] ss:$4 sm:$0x30] %v2
  %s8 = scalar_lea.vmem %s1, 120
  %9 = vst [vmem:[%s8] ss:$4 sm:$0xc0] %v2
  %s10 = scalar_lea.vmem %s0, 8
  %v11 = vld [vmem:[%s10] sm:$0xff]
  %s12 = scalar_lea.vmem %s1, 8
  %13 = vst [vmem:[%s12] ss:$4 sm:$0x3] %v11
  %s14 = scalar_lea.vmem %s1, 48
  %15 = vst [vmem:[%s14] ss:$4 sm:$0xc] %v11
  %s16 = scalar_lea.vmem %s1, 88
  %17 = vst [vmem:[%s16] ss:$4 sm:$0x30] %v11
  %s18 = scalar_lea.vmem %s1, 128
  %19 = vst [vmem:[%s18] ss:$4 sm:$0xc0] %v11
  %s20 = scalar_lea.vmem %s0, 16
  %v21 = vld [vmem:[%s20] sm:$0xff]
  %s22 = scalar_lea.vmem %s1, 16
  %23 = vst [vmem:[%s22] ss:$4 sm:$0x3] %v21
  %s24 = scalar_lea.vmem %s1, 56
  %25 = vst [vmem:[%s24] ss:$4 sm:$0xc] %v21
  %s26 = scalar_lea.vmem %s1, 96
  %27 = vst [vmem:[%s26] ss:$4 sm:$0x30] %v21
  %s28 = scalar_lea.vmem %s1, 136
  %29 = vst [vmem:[%s28] ss:$4 sm:$0xc0] %v21
  %s30 = scalar_lea.vmem %s0, 24
  %v31 = vld [vmem:[%s30] sm:$0xff]
  %s32 = scalar_lea.vmem %s1, 24
  %33 = vst [vmem:[%s32] ss:$4 sm:$0x3] %v31
  %s34 = scalar_lea.vmem %s1, 64
  %35 = vst [vmem:[%s34] ss:$4 sm:$0xc] %v31
  %s36 = scalar_lea.vmem %s1, 104
  %37 = vst [vmem:[%s36] ss:$4 sm:$0x30] %v31
  %s38 = scalar_lea.vmem %s1, 144
  %39 = vst [vmem:[%s38] ss:$4 sm:$0xc0] %v31
  %s40 = scalar_lea.vmem %s0, 32
  %v41 = vld [vmem:[%s40] sm:$0xff]
  %s42 = scalar_lea.vmem %s1, 32
  %43 = vst [vmem:[%s42] ss:$4 sm:$0x3] %v41
  %s44 = scalar_lea.vmem %s1, 72
  %45 = vst [vmem:[%s44] ss:$4 sm:$0xc] %v41
  %s46 = scalar_lea.vmem %s1, 112
  %47 = vst [vmem:[%s46] ss:$4 sm:$0x30] %v41
  %s48 = scalar_lea.vmem %s1, 152
  %49 = vst [vmem:[%s48] ss:$4 sm:$0xc0] %v41
  %s50 = scalar_lea.vmem %s0, 40
  %v51 = vld [vmem:[%s50] sm:$0xff]
  %s52 = scalar_lea.vmem %s1, 40
  %53 = vst [vmem:[%s52] ss:$4 sm:$0x3] %v51
  %s54 = scalar_lea.vmem %s1, 80
  %55 = vst [vmem:[%s54] ss:$4 sm:$0xc] %v51
  %s56 = scalar_lea.vmem %s1, 120
  %57 = vst [vmem:[%s56] ss:$4 sm:$0x30] %v51
  %s58 = scalar_lea.vmem %s1, 160
  %59 = vst [vmem:[%s58] ss:$4 sm:$0xc0] %v51
  %s60 = scalar_lea.vmem %s0, 48
  %v61 = vld [vmem:[%s60] sm:$0xff]
  %s62 = scalar_lea.vmem %s1, 1
  %63 = vst [vmem:[%s62] ss:$4 sm:$0x3] %v61
  %s64 = scalar_lea.vmem %s1, 41
  %65 = vst [vmem:[%s64] ss:$4 sm:$0xc] %v61
  %s66 = scalar_lea.vmem %s1, 81
  %67 = vst [vmem:[%s66] ss:$4 sm:$0x30] %v61
  %s68 = scalar_lea.vmem %s1, 121
  %69 = vst [vmem:[%s68] ss:$4 sm:$0xc0] %v61
  %s70 = scalar_lea.vmem %s0, 56
  %v71 = vld [vmem:[%s70] sm:$0xff]
  %s72 = scalar_lea.vmem %s1, 9
  %73 = vst [vmem:[%s72] ss:$4 sm:$0x3] %v71
  %s74 = scalar_lea.vmem %s1, 49
  %75 = vst [vmem:[%s74] ss:$4 sm:$0xc] %v71
  %s76 = scalar_lea.vmem %s1, 89
  %77 = vst [vmem:[%s76] ss:$4 sm:$0x30] %v71
  %s78 = scalar_lea.vmem %s1, 129
  %79 = vst [vmem:[%s78] ss:$4 sm:$0xc0] %v71
  %s80 = scalar_lea.vmem %s0, 64
  %v81 = vld [vmem:[%s80] sm:$0xff]
  %s82 = scalar_lea.vmem %s1, 17
  %83 = vst [vmem:[%s82] ss:$4 sm:$0x3] %v81
  %s84 = scalar_lea.vmem %s1, 57
  %85 = vst [vmem:[%s84] ss:$4 sm:$0xc] %v81
  %s86 = scalar_lea.vmem %s1, 97
  %87 = vst [vmem:[%s86] ss:$4 sm:$0x30] %v81
  %s88 = scalar_lea.vmem %s1, 137
  %89 = vst [vmem:[%s88] ss:$4 sm:$0xc0] %v81
  %s90 = scalar_lea.vmem %s0, 72
  %v91 = vld [vmem:[%s90] sm:$0xff]
  %s92 = scalar_lea.vmem %s1, 25
  %93 = vst [vmem:[%s92] ss:$4 sm:$0x3] %v91
  %s94 = scalar_lea.vmem %s1, 65
  %95 = vst [vmem:[%s94] ss:$4 sm:$0xc] %v91
  %s96 = scalar_lea.vmem %s1, 105
  %97 = vst [vmem:[%s96] ss:$4 sm:$0x30] %v91
  %s98 = scalar_lea.vmem %s1, 145
  %99 = vst [vmem:[%s98] ss:$4 sm:$0xc0] %v91
  %s100 = scalar_lea.vmem %s0, 80
  %v101 = vld [vmem:[%s100] sm:$0xff]
  %s102 = scalar_lea.vmem %s1, 33
  %103 = vst [vmem:[%s102] ss:$4 sm:$0x3] %v101
  %s104 = scalar_lea.vmem %s1, 73
  %105 = vst [vmem:[%s104] ss:$4 sm:$0xc] %v101
  %s106 = scalar_lea.vmem %s1, 113
  %107 = vst [vmem:[%s106] ss:$4 sm:$0x30] %v101
  %s108 = scalar_lea.vmem %s1, 153
  %109 = vst [vmem:[%s108] ss:$4 sm:$0xc0] %v101
  %s110 = scalar_lea.vmem %s0, 88
  %v111 = vld [vmem:[%s110] sm:$0xff]
  %s112 = scalar_lea.vmem %s1, 41
  %113 = vst [vmem:[%s112] ss:$4 sm:$0x3] %v111
  %s114 = scalar_lea.vmem %s1, 81
  %115 = vst [vmem:[%s114] ss:$4 sm:$0xc] %v111
  %s116 = scalar_lea.vmem %s1, 121
  %117 = vst [vmem:[%s116] ss:$4 sm:$0x30] %v111
  %s118 = scalar_lea.vmem %s1, 161
  %119 = vst [vmem:[%s118] ss:$4 sm:$0xc0] %v111
  %s120 = scalar_lea.vmem %s0, 96
  %v121 = vld [vmem:[%s120] sm:$0xff]
  %s122 = scalar_lea.vmem %s1, 2
  %123 = vst [vmem:[%s122] ss:$4 sm:$0x3] %v121
  %s124 = scalar_lea.vmem %s1, 42
  %125 = vst [vmem:[%s124] ss:$4 sm:$0xc] %v121
  %s126 = scalar_lea.vmem %s1, 82
  %127 = vst [vmem:[%s126] ss:$4 sm:$0x30] %v121
  %s128 = scalar_lea.vmem %s1, 122
  %129 = vst [vmem:[%s128] ss:$4 sm:$0xc0] %v121
  %s130 = scalar_lea.vmem %s0, 104
  %v131 = vld [vmem:[%s130] sm:$0xff]
  %s132 = scalar_lea.vmem %s1, 10
  %133 = vst [vmem:[%s132] ss:$4 sm:$0x3] %v131
  %s134 = scalar_lea.vmem %s1, 50
  %135 = vst [vmem:[%s134] ss:$4 sm:$0xc] %v131
  %s136 = scalar_lea.vmem %s1, 90
  %137 = vst [vmem:[%s136] ss:$4 sm:$0x30] %v131
  %s138 = scalar_lea.vmem %s1, 130
  %139 = vst [vmem:[%s138] ss:$4 sm:$0xc0] %v131
  %s140 = scalar_lea.vmem %s0, 112
  %v141 = vld [vmem:[%s140] sm:$0xff]
  %s142 = scalar_lea.vmem %s1, 18
  %143 = vst [vmem:[%s142] ss:$4 sm:$0x3] %v141
  %s144 = scalar_lea.vmem %s1, 58
  %145 = vst [vmem:[%s144] ss:$4 sm:$0xc] %v141
  %s146 = scalar_lea.vmem %s1, 98
  %147 = vst [vmem:[%s146] ss:$4 sm:$0x30] %v141
  %s148 = scalar_lea.vmem %s1, 138
  %149 = vst [vmem:[%s148] ss:$4 sm:$0xc0] %v141
  %s150 = scalar_lea.vmem %s0, 120
  %v151 = vld [vmem:[%s150] sm:$0xff]
  %s152 = scalar_lea.vmem %s1, 26
  %153 = vst [vmem:[%s152] ss:$4 sm:$0x3] %v151
  %s154 = scalar_lea.vmem %s1, 66
  %155 = vst [vmem:[%s154] ss:$4 sm:$0xc] %v151
  %s156 = scalar_lea.vmem %s1, 106
  %157 = vst [vmem:[%s156] ss:$4 sm:$0x30] %v151
  %s158 = scalar_lea.vmem %s1, 146
  %159 = vst [vmem:[%s158] ss:$4 sm:$0xc0] %v151
  %s160 = scalar_lea.vmem %s0, 128
  %v161 = vld [vmem:[%s160] sm:$0xff]
  %s162 = scalar_lea.vmem %s1, 34
  %163 = vst [vmem:[%s162] ss:$4 sm:$0x3] %v161
  %s164 = scalar_lea.vmem %s1, 74
  %165 = vst [vmem:[%s164] ss:$4 sm:$0xc] %v161
  %s166 = scalar_lea.vmem %s1, 114
  %167 = vst [vmem:[%s166] ss:$4 sm:$0x30] %v161
  %s168 = scalar_lea.vmem %s1, 154
  %169 = vst [vmem:[%s168] ss:$4 sm:$0xc0] %v161
  %s170 = scalar_lea.vmem %s0, 136
  %v171 = vld [vmem:[%s170] sm:$0xff]
  %s172 = scalar_lea.vmem %s1, 42
  %173 = vst [vmem:[%s172] ss:$4 sm:$0x3] %v171
  %s174 = scalar_lea.vmem %s1, 82
  %175 = vst [vmem:[%s174] ss:$4 sm:$0xc] %v171
  %s176 = scalar_lea.vmem %s1, 122
  %177 = vst [vmem:[%s176] ss:$4 sm:$0x30] %v171
  %s178 = scalar_lea.vmem %s1, 162
  %179 = vst [vmem:[%s178] ss:$4 sm:$0xc0] %v171
  %s180 = scalar_lea.vmem %s0, 144
  %v181 = vld [vmem:[%s180] sm:$0xff]
  %s182 = scalar_lea.vmem %s1, 3
  %183 = vst [vmem:[%s182] ss:$4 sm:$0x3] %v181
  %s184 = scalar_lea.vmem %s1, 43
  %185 = vst [vmem:[%s184] ss:$4 sm:$0xc] %v181
  %s186 = scalar_lea.vmem %s1, 83
  %187 = vst [vmem:[%s186] ss:$4 sm:$0x30] %v181
  %s188 = scalar_lea.vmem %s1, 123
  %189 = vst [vmem:[%s188] ss:$4 sm:$0xc0] %v181
  %s190 = scalar_lea.vmem %s0, 152
  %v191 = vld [vmem:[%s190] sm:$0xff]
  %s192 = scalar_lea.vmem %s1, 11
  %193 = vst [vmem:[%s192] ss:$4 sm:$0x3] %v191
  %s194 = scalar_lea.vmem %s1, 51
  %195 = vst [vmem:[%s194] ss:$4 sm:$0xc] %v191
  %s196 = scalar_lea.vmem %s1, 91
  %197 = vst [vmem:[%s196] ss:$4 sm:$0x30] %v191
  %s198 = scalar_lea.vmem %s1, 131
  %199 = vst [vmem:[%s198] ss:$4 sm:$0xc0] %v191
  %s200 = scalar_lea.vmem %s0, 160
  %v201 = vld [vmem:[%s200] sm:$0xff]
  %s202 = scalar_lea.vmem %s1, 19
  %203 = vst [vmem:[%s202] ss:$4 sm:$0x3] %v201
  %s204 = scalar_lea.vmem %s1, 59
  %205 = vst [vmem:[%s204] ss:$4 sm:$0xc] %v201
  %s206 = scalar_lea.vmem %s1, 99
  %207 = vst [vmem:[%s206] ss:$4 sm:$0x30] %v201
  %s208 = scalar_lea.vmem %s1, 139
  %209 = vst [vmem:[%s208] ss:$4 sm:$0xc0] %v201
  %s210 = scalar_lea.vmem %s0, 168
  %v211 = vld [vmem:[%s210] sm:$0xff]
  %s212 = scalar_lea.vmem %s1, 27
  %213 = vst [vmem:[%s212] ss:$4 sm:$0x3] %v211
  %s214 = scalar_lea.vmem %s1, 67
  %215 = vst [vmem:[%s214] ss:$4 sm:$0xc] %v211
  %s216 = scalar_lea.vmem %s1, 107
  %217 = vst [vmem:[%s216] ss:$4 sm:$0x30] %v211
  %s218 = scalar_lea.vmem %s1, 147
  %219 = vst [vmem:[%s218] ss:$4 sm:$0xc0] %v211
  %s220 = scalar_lea.vmem %s0, 176
  %v221 = vld [vmem:[%s220] sm:$0xff]
  %s222 = scalar_lea.vmem %s1, 35
  %223 = vst [vmem:[%s222] ss:$4 sm:$0x3] %v221
  %s224 = scalar_lea.vmem %s1, 75
  %225 = vst [vmem:[%s224] ss:$4 sm:$0xc] %v221
  %s226 = scalar_lea.vmem %s1, 115
  %227 = vst [vmem:[%s226] ss:$4 sm:$0x30] %v221
  %s228 = scalar_lea.vmem %s1, 155
  %229 = vst [vmem:[%s228] ss:$4 sm:$0xc0] %v221
  %s230 = scalar_lea.vmem %s0, 184
  %v231 = vld [vmem:[%s230] sm:$0xff]
  %s232 = scalar_lea.vmem %s1, 43
  %233 = vst [vmem:[%s232] ss:$4 sm:$0x3] %v231
  %s234 = scalar_lea.vmem %s1, 83
  %235 = vst [vmem:[%s234] ss:$4 sm:$0xc] %v231
  %s236 = scalar_lea.vmem %s1, 123
  %237 = vst [vmem:[%s236] ss:$4 sm:$0x30] %v231
  %s238 = scalar_lea.vmem %s1, 163
  %239 = vst [vmem:[%s238] ss:$4 sm:$0xc0] %v231

// kernel: conv1d_stride3.1
$region0: #{conv1d_stride3.1}
  #allocation0 [shape = 'u32[]', space=smem, size = 0x4, offset = 0x4, fixed_abs, tag = 'smem constant byte address 0x4 - core index']
  #allocation1 [shape = 'u32[144,128]{1,0:T(1,128)}', space=vmem, size = 0x12000, scoped, tag = 'internal scratch']
  %s0 = inlined_call_operand.vmem [shape: f32[32,768], index: 0, kind: input, shape index: {}]
  %s1 = inlined_call_operand.vmem [shape: bf16[768,256], index: 1, kind: input, shape index: {}]
  %s2 = inlined_call_operand.vmem [shape: f32[32,256], index: 2, kind: output, shape index: {}]
  %s3 = sld [smem:[#allocation0]]
  $region18: #{conv1d_stride3.1} parent=0
    _
  %s5 = ssub.s32 1, %s3
  %s6 = scalar_select 0, %s5, %s3
  // Predicated region
  $region2: #{conv1d_stride3.1} parent=0 // pred_check
    _
  $region3: #{conv1d_stride3.1} parent=0 // pred_check_branch
    %8 = sbr.rel (0) target = $region5
  $region4: #{conv1d_stride3.1} parent=0 // pred_region
    _
  $region5: #{conv1d_stride3.1} parent=0 // pred_fallthru
    _
  // Predicated region
  $region6: #{conv1d_stride3.1} parent=0 // pred_check
    _
  $region7: #{conv1d_stride3.1} parent=0 // pred_check_branch
    %10 = sbr.rel (0) target = $region9
  $region8: #{conv1d_stride3.1} parent=0 // pred_region
    _
  $region9: #{conv1d_stride3.1} parent=0 // pred_fallthru
    _
  %v11 = vld [vmem:[%s0] sm:$0xff]
  %v12 = vld [vmem:[%s0 + $0x8] sm:$0xff]
  %v13 = vld [vmem:[%s0 + $0x10] sm:$0xff]
  %v14 = vld [vmem:[%s0 + $0x18] sm:$0xff]
  %v15 = vld [vmem:[%s0 + $0x20] sm:$0xff]
  %v16 = vld [vmem:[%s0 + $0x28] sm:$0xff]
  %v17 = vld [vmem:[%s0 + $0x30] sm:$0xff]
  %v18 = vld [vmem:[%s0 + $0x38] sm:$0xff]
  %v19 = vld [vmem:[%s0 + $0x40] sm:$0xff]
  %v20 = vld [vmem:[%s0 + $0x48] sm:$0xff]
  %v21 = vld [vmem:[%s0 + $0x50] sm:$0xff]
  %v22 = vld [vmem:[%s0 + $0x58] sm:$0xff]
  %v23 = vld [vmem:[%s0 + $0x60] sm:$0xff]
  %v24 = vld [vmem:[%s0 + $0x68] sm:$0xff]
  %v25 = vld [vmem:[%s0 + $0x70] sm:$0xff]
  %v26 = vld [vmem:[%s0 + $0x78] sm:$0xff]
  %v27 = vld [vmem:[%s0 + $0x80] sm:$0xff]
  %v28 = vld [vmem:[%s0 + $0x88] sm:$0xff]
  %v29 = vld [vmem:[%s0 + $0x90] sm:$0xff]
  %v30 = vld [vmem:[%s0 + $0x98] sm:$0xff]
  %v31 = vld [vmem:[%s0 + $0xa0] sm:$0xff]
  %v32 = vld [vmem:[%s0 + $0xa8] sm:$0xff]
  %v33 = vld [vmem:[%s0 + $0xb0] sm:$0xff]
  %v34 = vld [vmem:[%s0 + $0xb8] sm:$0xff]
  %v35 = vpack.c.bf16 %v17, %v11
  %v36 = vpack.c.bf16 %v18, %v12
  %v37 = vpack.c.bf16 %v19, %v13
  %v38 = vpack.c.bf16 %v20, %v14
  %v39 = vpack.c.bf16 %v21, %v15
  %v40 = vpack.c.bf16 %v22, %v16
  %v41 = vpack.c.bf16 %v29, %v23
  %v42 = vpack.c.bf16 %v30, %v24
  %v43 = vpack.c.bf16 %v31, %v25
  %v44 = vpack.c.bf16 %v32, %v26
  %v45 = vpack.c.bf16 %v33, %v27
  %v46 = vpack.c.bf16 %v34, %v28
  %v47 = vld [vmem:[%s1] sm:$0xff]
  %v48 = vld [vmem:[%s1 + $0x8] sm:$0xff]
  %v49 = vld [vmem:[%s1 + $0x10] sm:$0xff]
  %v50 = vld [vmem:[%s1 + $0x18] sm:$0xff]
  %v51 = vld [vmem:[%s1 + $0x20] sm:$0xff]
  %v52 = vld [vmem:[%s1 + $0x28] sm:$0xff]
  %v53 = vld [vmem:[%s1 + $0x30] sm:$0xff]
  %v54 = vld [vmem:[%s1 + $0x38] sm:$0xff]
  %v55 = vld [vmem:[%s1 + $0x40] sm:$0xff]
  %v56 = vld [vmem:[%s1 + $0x48] sm:$0xff]
  %v57 = vld [vmem:[%s1 + $0x50] sm:$0xff]
  %v58 = vld [vmem:[%s1 + $0x58] sm:$0xff]
  %v59 = vld [vmem:[%s1 + $0x60] sm:$0xff]
  %v60 = vld [vmem:[%s1 + $0x68] sm:$0xff]
  %v61 = vld [vmem:[%s1 + $0x70] sm:$0xff]
  %v62 = vld [vmem:[%s1 + $0x78] sm:$0xff]
  %v63 = vld [vmem:[%s1 + $0x80] sm:$0xff]
  %v64 = vld [vmem:[%s1 + $0x88] sm:$0xff]
  %v65 = vld [vmem:[%s1 + $0x90] sm:$0xff]
  %v66 = vld [vmem:[%s1 + $0x98] sm:$0xff]
  %v67 = vld [vmem:[%s1 + $0xa0] sm:$0xff]
  %v68 = vld [vmem:[%s1 + $0xa8] sm:$0xff]
  %v69 = vld [vmem:[%s1 + $0xb0] sm:$0xff]
  %v70 = vld [vmem:[%s1 + $0xb8] sm:$0xff]
  %v71 = vld [vmem:[%s1 + $0xc0] sm:$0xff]
  %v72 = vld [vmem:[%s1 + $0xc8] sm:$0xff]
  %v73 = vld [vmem:[%s1 + $0xd0] sm:$0xff]
  %v74 = vld [vmem:[%s1 + $0xd8] sm:$0xff]
  %v75 = vld [vmem:[%s1 + $0xe0] sm:$0xff]
  %v76 = vld [vmem:[%s1 + $0xe8] sm:$0xff]
  %v77 = vld [vmem:[%s1 + $0xf0] sm:$0xff]
  %v78 = vld [vmem:[%s1 + $0xf8] sm:$0xff]
  %v79 = vld [vmem:[%s1 + $0x100] sm:$0xff]
  %v80 = vld [vmem:[%s1 + $0x108] sm:$0xff]
  %v81 = vld [vmem:[%s1 + $0x110] sm:$0xff]
  %v82 = vld [vmem:[%s1 + $0x118] sm:$0xff]
  %v83 = vld [vmem:[%s1 + $0x120] sm:$0xff]
  %v84 = vld [vmem:[%s1 + $0x128] sm:$0xff]
  %v85 = vld [vmem:[%s1 + $0x130] sm:$0xff]
  %v86 = vld [vmem:[%s1 + $0x138] sm:$0xff]
  %v87 = vld [vmem:[%s1 + $0x140] sm:$0xff]
  %v88 = vld [vmem:[%s1 + $0x148] sm:$0xff]
  %v89 = vld [vmem:[%s1 + $0x150] sm:$0xff]
  %v90 = vld [vmem:[%s1 + $0x158] sm:$0xff]
  %v91 = vld [vmem:[%s1 + $0x160] sm:$0xff]
  %v92 = vld [vmem:[%s1 + $0x168] sm:$0xff]
  %v93 = vld [vmem:[%s1 + $0x170] sm:$0xff]
  %v94 = vld [vmem:[%s1 + $0x178] sm:$0xff]
  %v95 = vld [vmem:[%s1 + $0x180] sm:$0xff]
  %v96 = vld [vmem:[%s1 + $0x188] sm:$0xff]
  %v97 = vld [vmem:[%s1 + $0x190] sm:$0xff]
  %v98 = vld [vmem:[%s1 + $0x198] sm:$0xff]
  %v99 = vld [vmem:[%s1 + $0x1a0] sm:$0xff]
  %v100 = vld [vmem:[%s1 + $0x1a8] sm:$0xff]
  %v101 = vld [vmem:[%s1 + $0x1b0] sm:$0xff]
  %v102 = vld [vmem:[%s1 + $0x1b8] sm:$0xff]
  %v103 = vld [vmem:[%s1 + $0x1c0] sm:$0xff]
  %v104 = vld [vmem:[%s1 + $0x1c8] sm:$0xff]
  %v105 = vld [vmem:[%s1 + $0x1d0] sm:$0xff]
  %v106 = vld [vmem:[%s1 + $0x1d8] sm:$0xff]
  %v107 = vld [vmem:[%s1 + $0x1e0] sm:$0xff]
  %v108 = vld [vmem:[%s1 + $0x1e8] sm:$0xff]
  %v109 = vld [vmem:[%s1 + $0x1f0] sm:$0xff]
  %v110 = vld [vmem:[%s1 + $0x1f8] sm:$0xff]
  %v111 = vld [vmem:[%s1 + $0x200] sm:$0xff]
  %v112 = vld [vmem:[%s1 + $0x208] sm:$0xff]
  %v113 = vld [vmem:[%s1 + $0x210] sm:$0xff]
  %v114 = vld [vmem:[%s1 + $0x218] sm:$0xff]
  %v115 = vld [vmem:[%s1 + $0x220] sm:$0xff]
  %v116 = vld [vmem:[%s1 + $0x228] sm:$0xff]
  %v117 = vld [vmem:[%s1 + $0x230] sm:$0xff]
  %v118 = vld [vmem:[%s1 + $0x238] sm:$0xff]
  %v119 = vld [vmem:[%s1 + $0x240] sm:$0xff]
  %v120 = vld [vmem:[%s1 + $0x248] sm:$0xff]
  %v121 = vld [vmem:[%s1 + $0x250] sm:$0xff]
  %v122 = vld [vmem:[%s1 + $0x258] sm:$0xff]
  %v123 = vld [vmem:[%s1 + $0x260] sm:$0xff]
  %v124 = vld [vmem:[%s1 + $0x268] sm:$0xff]
  %v125 = vld [vmem:[%s1 + $0x270] sm:$0xff]
  %v126 = vld [vmem:[%s1 + $0x278] sm:$0xff]
  %v127 = vld [vmem:[%s1 + $0x280] sm:$0xff]
  %v128 = vld [vmem:[%s1 + $0x288] sm:$0xff]
  %v129 = vld [vmem:[%s1 + $0x290] sm:$0xff]
  %v130 = vld [vmem:[%s1 + $0x298] sm:$0xff]
  %v131 = vld [vmem:[%s1 + $0x2a0] sm:$0xff]
  %v132 = vld [vmem:[%s1 + $0x2a8] sm:$0xff]
  %v133 = vld [vmem:[%s1 + $0x2b0] sm:$0xff]
  %v134 = vld [vmem:[%s1 + $0x2b8] sm:$0xff]
  %v135 = vld [vmem:[%s1 + $0x2c0] sm:$0xff]
  %v136 = vld [vmem:[%s1 + $0x2c8] sm:$0xff]
  %v137 = vld [vmem:[%s1 + $0x2d0] sm:$0xff]
  %v138 = vld [vmem:[%s1 + $0x2d8] sm:$0xff]
  %v139 = vld [vmem:[%s1 + $0x2e0] sm:$0xff]
  %v140 = vld [vmem:[%s1 + $0x2e8] sm:$0xff]
  %v141 = vld [vmem:[%s1 + $0x2f0] sm:$0xff]
  %v142 = vld [vmem:[%s1 + $0x2f8] sm:$0xff]
  %v239 = vunpack.c.l.b16 %v47
  %v240 = vunpack.c.h.b16 %v47
  %v241 = vunpack.c.l.b16 %v48
  %v242 = vunpack.c.h.b16 %v48
  %v243 = vunpack.c.l.b16 %v49
  %v244 = vunpack.c.h.b16 %v49
  %v245 = vunpack.c.l.b16 %v50
  %v246 = vunpack.c.h.b16 %v50
  %v247 = vunpack.c.l.b16 %v51
  %v248 = vunpack.c.h.b16 %v51
  %v249 = vunpack.c.l.b16 %v52
  %v250 = vunpack.c.h.b16 %v52
  %v251 = vunpack.c.l.b16 %v53
  %v252 = vunpack.c.h.b16 %v53
  %v253 = vunpack.c.l.b16 %v54
  %v254 = vunpack.c.h.b16 %v54
  %v255 = vunpack.c.l.b16 %v55
  %v256 = vunpack.c.h.b16 %v55
  %v257 = vunpack.c.l.b16 %v56
  %v258 = vunpack.c.h.b16 %v56
  %v259 = vunpack.c.l.b16 %v57
  %v260 = vunpack.c.h.b16 %v57
  %v261 = vunpack.c.l.b16 %v58
  %v262 = vunpack.c.h.b16 %v58
  %v263 = vunpack.c.l.b16 %v59
  %v264 = vunpack.c.h.b16 %v59
  %v265 = vunpack.c.l.b16 %v60
  %v266 = vunpack.c.h.b16 %v60
  %v267 = vunpack.c.l.b16 %v61
  %v268 = vunpack.c.h.b16 %v61
  %v269 = vunpack.c.l.b16 %v62
  %v270 = vunpack.c.h.b16 %v62
  %v271 = vunpack.c.l.b16 %v63
  %v272 = vunpack.c.h.b16 %v63
  %v273 = vunpack.c.l.b16 %v64
  %v274 = vunpack.c.h.b16 %v64
  %v275 = vunpack.c.l.b16 %v65
  %v276 = vunpack.c.h.b16 %v65
  %v277 = vunpack.c.l.b16 %v66
  %v278 = vunpack.c.h.b16 %v66
  %v279 = vunpack.c.l.b16 %v67
  %v280 = vunpack.c.h.b16 %v67
  %v281 = vunpack.c.l.b16 %v68
  %v282 = vunpack.c.h.b16 %v68
  %v283 = vunpack.c.l.b16 %v69
  %v284 = vunpack.c.h.b16 %v69
  %v285 = vunpack.c.l.b16 %v70
  %v286 = vunpack.c.h.b16 %v70
  %v287 = vunpack.c.l.b16 %v71
  %v288 = vunpack.c.h.b16 %v71
  %v289 = vunpack.c.l.b16 %v72
  %v290 = vunpack.c.h.b16 %v72
  %v291 = vunpack.c.l.b16 %v73
  %v292 = vunpack.c.h.b16 %v73
  %v293 = vunpack.c.l.b16 %v74
  %v294 = vunpack.c.h.b16 %v74
  %v295 = vunpack.c.l.b16 %v75
  %v296 = vunpack.c.h.b16 %v75
  %v297 = vunpack.c.l.b16 %v76
  %v298 = vunpack.c.h.b16 %v76
  %v299 = vunpack.c.l.b16 %v77
  %v300 = vunpack.c.h.b16 %v77
  %v301 = vunpack.c.l.b16 %v78
  %v302 = vunpack.c.h.b16 %v78
  %v303 = vunpack.c.l.b16 %v79
  %v304 = vunpack.c.h.b16 %v79
  %v305 = vunpack.c.l.b16 %v80
  %v306 = vunpack.c.h.b16 %v80
  %v307 = vunpack.c.l.b16 %v81
  %v308 = vunpack.c.h.b16 %v81
  %v309 = vunpack.c.l.b16 %v82
  %v310 = vunpack.c.h.b16 %v82
  %v311 = vunpack.c.l.b16 %v83
  %v312 = vunpack.c.h.b16 %v83
  %v313 = vunpack.c.l.b16 %v84
  %v314 = vunpack.c.h.b16 %v84
  %v315 = vunpack.c.l.b16 %v85
  %v316 = vunpack.c.h.b16 %v85
  %v317 = vunpack.c.l.b16 %v86
  %v318 = vunpack.c.h.b16 %v86
  %v319 = vunpack.c.l.b16 %v87
  %v320 = vunpack.c.h.b16 %v87
  %v321 = vunpack.c.l.b16 %v88
  %v322 = vunpack.c.h.b16 %v88
  %v323 = vunpack.c.l.b16 %v89
  %v324 = vunpack.c.h.b16 %v89
  %v325 = vunpack.c.l.b16 %v90
  %v326 = vunpack.c.h.b16 %v90
  %v327 = vunpack.c.l.b16 %v91
  %v328 = vunpack.c.h.b16 %v91
  %v329 = vunpack.c.l.b16 %v92
  %v330 = vunpack.c.h.b16 %v92
  %v331 = vunpack.c.l.b16 %v93
  %v332 = vunpack.c.h.b16 %v93
  %v333 = vunpack.c.l.b16 %v94
  %v334 = vunpack.c.h.b16 %v94
  %v335 = vunpack.c.l.b16 %v95
  %v336 = vunpack.c.h.b16 %v95
  %v337 = vunpack.c.l.b16 %v96
  %v338 = vunpack.c.h.b16 %v96
  %v339 = vunpack.c.l.b16 %v97
  %v340 = vunpack.c.h.b16 %v97
  %v341 = vunpack.c.l.b16 %v98
  %v342 = vunpack.c.h.b16 %v98
  %v343 = vunpack.c.l.b16 %v99
  %v344 = vunpack.c.h.b16 %v99
  %v345 = vunpack.c.l.b16 %v100
  %v346 = vunpack.c.h.b16 %v100
  %v347 = vunpack.c.l.b16 %v101
  %v348 = vunpack.c.h.b16 %v101
  %v349 = vunpack.c.l.b16 %v102
  %v350 = vunpack.c.h.b16 %v102
  %v351 = vunpack.c.l.b16 %v103
  %v352 = vunpack.c.h.b16 %v103
  %v353 = vunpack.c.l.b16 %v104
  %v354 = vunpack.c.h.b16 %v104
  %v355 = vunpack.c.l.b16 %v105
  %v356 = vunpack.c.h.b16 %v105
  %v357 = vunpack.c.l.b16 %v106
  %v358 = vunpack.c.h.b16 %v106
  %v359 = vunpack.c.l.b16 %v107
  %v360 = vunpack.c.h.b16 %v107
  %v361 = vunpack.c.l.b16 %v108
  %v362 = vunpack.c.h.b16 %v108
  %v363 = vunpack.c.l.b16 %v109
  %v364 = vunpack.c.h.b16 %v109
  %v365 = vunpack.c.l.b16 %v110
  %v366 = vunpack.c.h.b16 %v110
  %v367 = vunpack.c.l.b16 %v111
  %v368 = vunpack.c.h.b16 %v111
  %v369 = vunpack.c.l.b16 %v112
  %v370 = vunpack.c.h.b16 %v112
  %v371 = vunpack.c.l.b16 %v113
  %v372 = vunpack.c.h.b16 %v113
  %v373 = vunpack.c.l.b16 %v114
  %v374 = vunpack.c.h.b16 %v114
  %v375 = vunpack.c.l.b16 %v115
  %v376 = vunpack.c.h.b16 %v115
  %v377 = vunpack.c.l.b16 %v116
  %v378 = vunpack.c.h.b16 %v116
  %v379 = vunpack.c.l.b16 %v117
  %v380 = vunpack.c.h.b16 %v117
  %v381 = vunpack.c.l.b16 %v118
  %v382 = vunpack.c.h.b16 %v118
  %v383 = vunpack.c.l.b16 %v119
  %v384 = vunpack.c.h.b16 %v119
  %v385 = vunpack.c.l.b16 %v120
  %v386 = vunpack.c.h.b16 %v120
  %v387 = vunpack.c.l.b16 %v121
  %v388 = vunpack.c.h.b16 %v121
  %v389 = vunpack.c.l.b16 %v122
  %v390 = vunpack.c.h.b16 %v122
  %v391 = vunpack.c.l.b16 %v123
  %v392 = vunpack.c.h.b16 %v123
  %v393 = vunpack.c.l.b16 %v124
  %v394 = vunpack.c.h.b16 %v124
  %v395 = vunpack.c.l.b16 %v125
  %v396 = vunpack.c.h.b16 %v125
  %v397 = vunpack.c.l.b16 %v126
  %v398 = vunpack.c.h.b16 %v126
  %v399 = vunpack.c.l.b16 %v127
  %v400 = vunpack.c.h.b16 %v127
  %v401 = vunpack.c.l.b16 %v128
  %v402 = vunpack.c.h.b16 %v128
  %v403 = vunpack.c.l.b16 %v129
  %v404 = vunpack.c.h.b16 %v129
  %v405 = vunpack.c.l.b16 %v130
  %v406 = vunpack.c.h.b16 %v130
  %v407 = vunpack.c.l.b16 %v131
  %v408 = vunpack.c.h.b16 %v131
  %v409 = vunpack.c.l.b16 %v132
  %v410 = vunpack.c.h.b16 %v132
  %v411 = vunpack.c.l.b16 %v133
  %v412 = vunpack.c.h.b16 %v133
  %v413 = vunpack.c.l.b16 %v134
  %v414 = vunpack.c.h.b16 %v134
  %v415 = vunpack.c.l.b16 %v135
  %v416 = vunpack.c.h.b16 %v135
  %v417 = vunpack.c.l.b16 %v136
  %v418 = vunpack.c.h.b16 %v136
  %v419 = vunpack.c.l.b16 %v137
  %v420 = vunpack.c.h.b16 %v137
  %v421 = vunpack.c.l.b16 %v138
  %v422 = vunpack.c.h.b16 %v138
  %v423 = vunpack.c.l.b16 %v139
  %v424 = vunpack.c.h.b16 %v139
  %v425 = vunpack.c.l.b16 %v140
  %v426 = vunpack.c.h.b16 %v140
  %v427 = vunpack.c.l.b16 %v141
  %v428 = vunpack.c.h.b16 %v141
  %v429 = vunpack.c.l.b16 %v142
  %v430 = vunpack.c.h.b16 %v142
  %v431 = vpack.c.b16 %v241, %v239
  %v432 = vpack.c.b16 %v242, %v240
  %v433 = vpack.c.b16 %v245, %v243
  %v434 = vpack.c.b16 %v246, %v244
  %v435 = vpack.c.b16 %v249, %v247
  %v436 = vpack.c.b16 %v250, %v248
  %v437 = vpack.c.b16 %v253, %v251
  %v438 = vpack.c.b16 %v254, %v252
  %v439 = vpack.c.b16 %v257, %v255
  %v440 = vpack.c.b16 %v258, %v256
  %v441 = vpack.c.b16 %v261, %v259
  %v442 = vpack.c.b16 %v262, %v260
  %v443 = vpack.c.b16 %v265, %v263
  %v444 = vpack.c.b16 %v266, %v264
  %v445 = vpack.c.b16 %v269, %v267
  %v446 = vpack.c.b16 %v270, %v268
  %v447 = vpack.c.b16 %v273, %v271
  %v448 = vpack.c.b16 %v274, %v272
  %v449 = vpack.c.b16 %v277, %v275
  %v450 = vpack.c.b16 %v278, %v276
  %v451 = vpack.c.b16 %v281, %v279
  %v452 = vpack.c.b16 %v282, %v280
  %v453 = vpack.c.b16 %v285, %v283
  %v454 = vpack.c.b16 %v286, %v284
  %v455 = vpack.c.b16 %v289, %v287
  %v456 = vpack.c.b16 %v290, %v288
  %v457 = vpack.c.b16 %v293, %v291
  %v458 = vpack.c.b16 %v294, %v292
  %v459 = vpack.c.b16 %v297, %v295
  %v460 = vpack.c.b16 %v298, %v296
  %v461 = vpack.c.b16 %v301, %v299
  %v462 = vpack.c.b16 %v302, %v300
  %v463 = vpack.c.b16 %v305, %v303
  %v464 = vpack.c.b16 %v306, %v304
  %v465 = vpack.c.b16 %v309, %v307
  %v466 = vpack.c.b16 %v310, %v308
  %v467 = vpack.c.b16 %v313, %v311
  %v468 = vpack.c.b16 %v314, %v312
  %v469 = vpack.c.b16 %v317, %v315
  %v470 = vpack.c.b16 %v318, %v316
  %v471 = vpack.c.b16 %v321, %v319
  %v472 = vpack.c.b16 %v322, %v320
  %v473 = vpack.c.b16 %v325, %v323
  %v474 = vpack.c.b16 %v326, %v324
  %v475 = vpack.c.b16 %v329, %v327
  %v476 = vpack.c.b16 %v330, %v328
  %v477 = vpack.c.b16 %v333, %v331
  %v478 = vpack.c.b16 %v334, %v332
  %v479 = vpack.c.b16 %v337, %v335
  %v480 = vpack.c.b16 %v338, %v336
  %v481 = vpack.c.b16 %v341, %v339
  %v482 = vpack.c.b16 %v342, %v340
  %v483 = vpack.c.b16 %v345, %v343
  %v484 = vpack.c.b16 %v346, %v344
  %v485 = vpack.c.b16 %v349, %v347
  %v486 = vpack.c.b16 %v350, %v348
  %v487 = vpack.c.b16 %v353, %v351
  %v488 = vpack.c.b16 %v354, %v352
  %v489 = vpack.c.b16 %v357, %v355
  %v490 = vpack.c.b16 %v358, %v356
  %v491 = vpack.c.b16 %v361, %v359
  %v492 = vpack.c.b16 %v362, %v360
  %v493 = vpack.c.b16 %v365, %v363
  %v494 = vpack.c.b16 %v366, %v364
  %v495 = vpack.c.b16 %v369, %v367
  %v496 = vpack.c.b16 %v370, %v368
  %v497 = vpack.c.b16 %v373, %v371
  %v498 = vpack.c.b16 %v374, %v372
  %v499 = vpack.c.b16 %v377, %v375
  %v500 = vpack.c.b16 %v378, %v376
  %v501 = vpack.c.b16 %v381, %v379
  %v502 = vpack.c.b16 %v382, %v380
  %v503 = vpack.c.b16 %v385, %v383
  %v504 = vpack.c.b16 %v386, %v384
  %v505 = vpack.c.b16 %v389, %v387
  %v506 = vpack.c.b16 %v390, %v388
  %v507 = vpack.c.b16 %v393, %v391
  %v508 = vpack.c.b16 %v394, %v392
  %v509 = vpack.c.b16 %v397, %v395
  %v510 = vpack.c.b16 %v398, %v396
  %v511 = vpack.c.b16 %v401, %v399
  %v512 = vpack.c.b16 %v402, %v400
  %v513 = vpack.c.b16 %v405, %v403
  %v514 = vpack.c.b16 %v406, %v404
  %v515 = vpack.c.b16 %v409, %v407
  %v516 = vpack.c.b16 %v410, %v408
  %v517 = vpack.c.b16 %v413, %v411
  %v518 = vpack.c.b16 %v414, %v412
  %v519 = vpack.c.b16 %v417, %v415
  %v520 = vpack.c.b16 %v418, %v416
  %v521 = vpack.c.b16 %v421, %v419
  %v522 = vpack.c.b16 %v422, %v420
  %v523 = vpack.c.b16 %v425, %v423
  %v524 = vpack.c.b16 %v426, %v424
  %v525 = vpack.c.b16 %v429, %v427
  %v526 = vpack.c.b16 %v430, %v428
  %623 = vmatprep.subr.bf16.mxu0 %v432
  %624 = vmatpush1.bf16.msra.mxu0 %v431
  %625 = vmatprep.subr.bf16.mxu0 %v434
  %626 = vmatpush1.bf16.msra.mxu0 %v433
  %627 = vmatprep.subr.bf16.mxu0 %v436
  %628 = vmatpush1.bf16.msra.mxu0 %v435
  %629 = vmatprep.subr.bf16.mxu0 %v438
  %630 = vmatpush1.bf16.msra.mxu0 %v437
  %631 = vmatprep.subr.bf16.mxu0 %v440
  %632 = vmatpush1.bf16.msra.mxu0 %v439
  %633 = vmatprep.subr.bf16.mxu0 %v442
  %634 = vmatpush1.bf16.msra.mxu0 %v441
  %635 = vmatprep.subr.bf16.mxu0 %v444
  %636 = vmatpush1.bf16.msra.mxu0 %v443
  %637 = vmatprep.subr.bf16.mxu0 %v446
  %638 = vmatpush1.bf16.msra.mxu0 %v445
  %639 = vmatprep.subr.bf16.mxu0 %v448
  %640 = vmatpush1.bf16.msra.mxu0 %v447
  %641 = vmatprep.subr.bf16.mxu0 %v450
  %642 = vmatpush1.bf16.msra.mxu0 %v449
  %643 = vmatprep.subr.bf16.mxu0 %v452
  %644 = vmatpush1.bf16.msra.mxu0 %v451
  %645 = vmatprep.subr.bf16.mxu0 %v454
  %646 = vmatpush1.bf16.msra.mxu0 %v453
  %647 = vmatprep.subr.bf16.mxu0 %v456
  %648 = vmatpush1.bf16.msra.mxu0 %v455
  %649 = vmatprep.subr.bf16.mxu0 %v458
  %650 = vmatpush1.bf16.msra.mxu0 %v457
  %651 = vmatprep.subr.bf16.mxu0 %v460
  %652 = vmatpush1.bf16.msra.mxu0 %v459
  %653 = vmatprep.subr.bf16.mxu0 %v462
  %654 = vmatpush1.bf16.msra.mxu0 %v461
  %655 = vmatprep.mubr.bf16.mxu0 %v36
  %656 = vmatmul.mubr.bf16.gmra.mrb[0].mxu0 %v35
  %v657 = vpop.f32.mrb[0].mxu0
  %v658 = vadd.f32 0.0, %v657
  %v659 = vpop.f32.mrb[0].mxu0
  %v660 = vadd.f32 0.0, %v659
  %v661 = vpop.f32.mrb[0].mxu0
  %v662 = vadd.f32 0.0, %v661
  %v663 = vpop.f32.mrb[0].mxu0
  %v664 = vadd.f32 0.0, %v663
  %665 = vmatprep.mubr.bf16.mxu0 %v42
  %666 = vmatmul.mubr.bf16.gmra.mrb[0].mxu0 %v41
  %v667 = vpop.f32.mrb[0].mxu0
  %v668 = vadd.f32 0.0, %v667
  %v669 = vpop.f32.mrb[0].mxu0
  %v670 = vadd.f32 0.0, %v669
  %v671 = vpop.f32.mrb[0].mxu0
  %v672 = vadd.f32 0.0, %v671
  %v673 = vpop.f32.mrb[0].mxu0
  %v674 = vadd.f32 0.0, %v673
  %675 = vdwg.mxu0
  %676 = vmatprep.subr.bf16.mxu0 %v464
  %677 = vmatpush1.bf16.msra.mxu0 %v463
  %678 = vmatprep.subr.bf16.mxu0 %v466
  %679 = vmatpush1.bf16.msra.mxu0 %v465
  %680 = vmatprep.subr.bf16.mxu0 %v468
  %681 = vmatpush1.bf16.msra.mxu0 %v467
  %682 = vmatprep.subr.bf16.mxu0 %v470
  %683 = vmatpush1.bf16.msra.mxu0 %v469
  %684 = vmatprep.subr.bf16.mxu0 %v472
  %685 = vmatpush1.bf16.msra.mxu0 %v471
  %686 = vmatprep.subr.bf16.mxu0 %v474
  %687 = vmatpush1.bf16.msra.mxu0 %v473
  %688 = vmatprep.subr.bf16.mxu0 %v476
  %689 = vmatpush1.bf16.msra.mxu0 %v475
  %690 = vmatprep.subr.bf16.mxu0 %v478
  %691 = vmatpush1.bf16.msra.mxu0 %v477
  %692 = vmatprep.subr.bf16.mxu0 %v480
  %693 = vmatpush1.bf16.msra.mxu0 %v479
  %694 = vmatprep.subr.bf16.mxu0 %v482
  %695 = vmatpush1.bf16.msra.mxu0 %v481
  %696 = vmatprep.subr.bf16.mxu0 %v484
  %697 = vmatpush1.bf16.msra.mxu0 %v483
  %698 = vmatprep.subr.bf16.mxu0 %v486
  %699 = vmatpush1.bf16.msra.mxu0 %v485
  %700 = vmatprep.subr.bf16.mxu0 %v488
  %701 = vmatpush1.bf16.msra.mxu0 %v487
  %702 = vmatprep.subr.bf16.mxu0 %v490
  %703 = vmatpush1.bf16.msra.mxu0 %v489
  %704 = vmatprep.subr.bf16.mxu0 %v492
  %705 = vmatpush1.bf16.msra.mxu0 %v491
  %706 = vmatprep.subr.bf16.mxu0 %v494
  %707 = vmatpush1.bf16.msra.mxu0 %v493
  %708 = vmatprep.mubr.bf16.mxu0 %v38
  %709 = vmatmul.mubr.bf16.gmra.mrb[0].mxu0 %v37
  %v710 = vpop.f32.mrb[0].mxu0
  %v711 = vadd.f32 %v658, %v710
  %v712 = vpop.f32.mrb[0].mxu0
  %v713 = vadd.f32 %v660, %v712
  %v714 = vpop.f32.mrb[0].mxu0
  %v715 = vadd.f32 %v662, %v714
  %v716 = vpop.f32.mrb[0].mxu0
  %v717 = vadd.f32 %v664, %v716
  %718 = vmatprep.mubr.bf16.mxu0 %v44
  %719 = vmatmul.mubr.bf16.gmra.mrb[0].mxu0 %v43
  %v720 = vpop.f32.mrb[0].mxu0
  %v721 = vadd.f32 %v668, %v720
  %v722 = vpop.f32.mrb[0].mxu0
  %v723 = vadd.f32 %v670, %v722
  %v724 = vpop.f32.mrb[0].mxu0
  %v725 = vadd.f32 %v672, %v724
  %v726 = vpop.f32.mrb[0].mxu0
  %v727 = vadd.f32 %v674, %v726
  %728 = vdwg.mxu0
  %729 = vmatprep.subr.bf16.mxu0 %v496
  %730 = vmatpush1.bf16.msra.mxu0 %v495
  %731 = vmatprep.subr.bf16.mxu0 %v498
  %732 = vmatpush1.bf16.msra.mxu0 %v497
  %733 = vmatprep.subr.bf16.mxu0 %v500
  %734 = vmatpush1.bf16.msra.mxu0 %v499
  %735 = vmatprep.subr.bf16.mxu0 %v502
  %736 = vmatpush1.bf16.msra.mxu0 %v501
  %737 = vmatprep.subr.bf16.mxu0 %v504
  %738 = vmatpush1.bf16.msra.mxu0 %v503
  %739 = vmatprep.subr.bf16.mxu0 %v506
  %740 = vmatpush1.bf16.msra.mxu0 %v505
  %741 = vmatprep.subr.bf16.mxu0 %v508
  %742 = vmatpush1.bf16.msra.mxu0 %v507
  %743 = vmatprep.subr.bf16.mxu0 %v510
  %744 = vmatpush1.bf16.msra.mxu0 %v509
  %745 = vmatprep.subr.bf16.mxu0 %v512
  %746 = vmatpush1.bf16.msra.mxu0 %v511
  %747 = vmatprep.subr.bf16.mxu0 %v514
  %748 = vmatpush1.bf16.msra.mxu0 %v513
  %749 = vmatprep.subr.bf16.mxu0 %v516
  %750 = vmatpush1.bf16.msra.mxu0 %v515
  %751 = vmatprep.subr.bf16.mxu0 %v518
  %752 = vmatpush1.bf16.msra.mxu0 %v517
  %753 = vmatprep.subr.bf16.mxu0 %v520
  %754 = vmatpush1.bf16.msra.mxu0 %v519
  %755 = vmatprep.subr.bf16.mxu0 %v522
  %756 = vmatpush1.bf16.msra.mxu0 %v521
  %757 = vmatprep.subr.bf16.mxu0 %v524
  %758 = vmatpush1.bf16.msra.mxu0 %v523
  %759 = vmatprep.subr.bf16.mxu0 %v526
  %760 = vmatpush1.bf16.msra.mxu0 %v525
  %761 = vmatprep.mubr.bf16.mxu0 %v40
  %762 = vmatmul.mubr.bf16.gmra.mrb[0].mxu0 %v39
  %v763 = vpop.f32.mrb[0].mxu0
  %v764 = vadd.f32 %v711, %v763
  %v765 = vpop.f32.mrb[0].mxu0
  %v766 = vadd.f32 %v713, %v765
  %v767 = vpop.f32.mrb[0].mxu0
  %v768 = vadd.f32 %v715, %v767
  %v769 = vpop.f32.mrb[0].mxu0
  %v770 = vadd.f32 %v717, %v769
  %771 = vmatprep.mubr.bf16.mxu0 %v46
  %772 = vmatmul.mubr.bf16.gmra.mrb[0].mxu0 %v45
  %v773 = vpop.f32.mrb[0].mxu0
  %v774 = vadd.f32 %v721, %v773
  %v775 = vpop.f32.mrb[0].mxu0
  %v776 = vadd.f32 %v723, %v775
  %v777 = vpop.f32.mrb[0].mxu0
  %v778 = vadd.f32 %v725, %v777
  %v779 = vpop.f32.mrb[0].mxu0
  %v780 = vadd.f32 %v727, %v779
  %781 = vdwg.mxu0
  %782 = vst [vmem:[%s2] sm:$0xff] %v764
  %783 = vst [vmem:[%s2 + $0x8] sm:$0xff] %v766
  %784 = vst [vmem:[%s2 + $0x10] sm:$0xff] %v768
  %785 = vst [vmem:[%s2 + $0x18] sm:$0xff] %v770
  %786 = vst [vmem:[%s2 + $0x20] sm:$0xff] %v774
  %787 = vst [vmem:[%s2 + $0x28] sm:$0xff] %v776
  %788 = vst [vmem:[%s2 + $0x30] sm:$0xff] %v778
  %789 = vst [vmem:[%s2 + $0x38] sm:$0xff] %v780
  // Predicated region
  $region10: #{conv1d_stride3.1} parent=0 // pred_check
    _
  $region11: #{conv1d_stride3.1} parent=0 // pred_check_branch
    %791 = sbr.rel (0) target = $region13
  $region12: #{conv1d_stride3.1} parent=0 // pred_region
    _
  $region13: #{conv1d_stride3.1} parent=0 // pred_fallthru
    _
  // Predicated region
  $region14: #{conv1d_stride3.1} parent=0 // pred_check
    _
  $region15: #{conv1d_stride3.1} parent=0 // pred_check_branch
    %793 = sbr.rel (0) target = $region17
  $region16: #{conv1d_stride3.1} parent=0 // pred_region
    _
  $region17: #{conv1d_stride3.1} parent=0 // pred_fallthru
    _

</llo_original>
